<compile_context>
chip_gen: v5e
topology: v5e:2x2
jax: 0.10.0
libtpu: 0.0.40
codegen_flags: <defaults>
</compile_context>

<pallas_src>
import functools

import jax
import jax.numpy as jnp
from jax.experimental import pallas as pl
from jax.experimental.pallas import tpu as pltpu


def _round_up(x, m):
    return ((x + m - 1) // m) * m


def _tpu_info():
    """(vmem_capacity_bytes, tensorcores_per_chip) with conservative fallbacks."""
    vmem_cap = 64 * 1024 * 1024   # safe on every generation (v7x physical)
    n_tc = 1                      # never shrink tiles unless we KNOW 2 TCs
    try:
        info = pltpu.get_tpu_info()
        vmem_cap = int(getattr(info, "vmem_capacity_bytes", vmem_cap))
        for attr in ("num_cores", "tensorcores_per_chip", "core_count"):
            v = getattr(info, attr, None)
            if v is not None:
                n_tc = int(v)
                break
    except Exception:
        pass
    return vmem_cap, max(1, n_tc)


def _matmul_bn_act_kernel(x_ref, w_ref, scale_ref, bias_ref, o_ref, acc_ref, *,
                          activation):
    """One (tm, tn) output tile; grid axis 2 reduces over K tiles."""
    @pl.when(pl.program_id(2) == 0)
    def _init():
        acc_ref[...] = jnp.zeros_like(acc_ref)

    acc_ref[...] += jnp.dot(x_ref[...], w_ref[...],
                            preferred_element_type=jnp.float32)

    @pl.when(pl.program_id(2) == pl.num_programs(2) - 1)
    def _finalize():
        y = acc_ref[...] * scale_ref[...] + bias_ref[...]
        if activation:
            y = jnp.maximum(y, 0.0)
        o_ref[...] = y.astype(o_ref.dtype)


def _im2col_nhwc(x_nhwc, k, s, p):
    """x: (N, H, W, Cin) -> patches (N*OH*OW, k*k*Cin) with Cin minor."""
    n, h, w, cin = x_nhwc.shape
    xp = jnp.pad(x_nhwc, ((0, 0), (p, p), (p, p), (0, 0)))
    oh = (h + 2 * p - k) // s + 1
    ow = (w + 2 * p - k) // s + 1
    slabs = []
    for kh in range(k):
        for kw in range(k):
            slabs.append(xp[:, kh:kh + s * oh:s, kw:kw + s * ow:s, :])
    patches = jnp.stack(slabs, axis=3)               # (N, OH, OW, k*k, Cin)
    return patches.reshape(n * oh * ow, k * k * cin), oh, ow


def conv2d_bn_relu(x, weight, conv_bias, gamma, beta, running_mean, running_var,
                   *, k, s, p, activation=True, batch_norm=True, eps=1e-5,
                   max_tm=1024, max_tk=2048, compute_dtype=jnp.bfloat16,
                   out_dtype=None, nhwc_out=False):
    """x: (N, Cin, H, W) NCHW; weight: (Cout, Cin, k, k). Returns NCHW by default."""
    n, cin, h, w = x.shape
    cout = weight.shape[0]
    out_dtype = x.dtype if out_dtype is None else out_dtype
    if conv_bias is None:  # nn.Conv2d(..., bias=False)
        conv_bias = jnp.zeros((cout,), jnp.float32)

    # bf16 BEFORE the unfold (halves patch-matrix HBM bytes); NHWC / Cin-minor
    # so the unfold is near-contiguous copies.
    x_nhwc = jnp.transpose(x.astype(compute_dtype), (0, 2, 3, 1))
    patches, oh, ow = _im2col_nhwc(x_nhwc, k, s, p)          # (M, k*k*Cin)
    m, kk = patches.shape

    # Weight in (kh, kw, Cin, Cout) order -> (K, Cout), matching the patch K order.
    w_mat = jnp.transpose(weight.astype(compute_dtype), (2, 3, 1, 0)).reshape(kk, cout)

    # Fold conv bias + BatchNorm (inference) into per-output-channel scale/bias.
    if batch_norm:
        scale = gamma / jnp.sqrt(running_var + eps)
        bias = beta + (conv_bias - running_mean) * scale
    else:
        scale = jnp.ones((cout,), jnp.float32)
        bias = conv_bias
    scale = scale.reshape(1, cout).astype(jnp.float32)
    bias = bias.reshape(1, cout).astype(jnp.float32)

    vmem_cap, n_tc = _tpu_info()

    # ---- Cout tiling: pad to a lane multiple (128); collapse to one tile when
    # modest so each patch tile is read from HBM exactly once.
    cout_pad = _round_up(cout, 128)
    if cout_pad <= 512:
        tn = cout_pad
    elif cout_pad % 256 == 0:
        tn = 256      # matches v6e/v7x 256^2 MXU; 128 tiles also fine on v5e
    else:
        tn = 128

    # ---- K tiling: full-dimension block (NO zero padding) whenever K fits one
    # tile; otherwise pad to a 128 multiple and tile.
    if kk <= max_tk:
        kk_pad, tk = kk, kk
    else:
        kk_pad = _round_up(kk, 128)
        tk = min(max_tk, kk_pad)
        while kk_pad % tk:
            tk -= 128

    # ---- M tiling: large tiles amortize ~0.35us/step; only shrink for extra
    # parallelism on multi-TensorCore chips (v7x), and only when the whole
    # parallel grid (M-steps * Cout-steps) would otherwise be a single step.
    tm = min(max_tm, _round_up(m, 8))
    if n_tc >= 2:
        while tm > 128 and ((m + tm - 1) // tm) * (cout_pad // tn) < 2:
            tm = max(128, _round_up(tm // 2, 8))
    m_pad = _round_up(m, tm)

    # ---- pad operands (zero padding along K/M is numerically inert; Cout
    # padding is sliced off after the call).
    if m_pad != m or kk_pad != kk:
        patches = jnp.pad(patches, ((0, m_pad - m), (0, kk_pad - kk)))
    if kk_pad != kk or cout_pad != cout:
        w_mat = jnp.pad(w_mat, ((0, kk_pad - kk), (0, cout_pad - cout)))
    if cout_pad != cout:
        scale = jnp.pad(scale, ((0, 0), (0, cout_pad - cout)))
        bias = jnp.pad(bias, ((0, 0), (0, cout_pad - cout)))

    grid = (m_pad // tm, cout_pad // tn, kk_pad // tk)

    # VMEM budget: double-buffered input/weight/output tiles + f32 accumulator.
    in_b = jnp.dtype(compute_dtype).itemsize
    out_b = jnp.dtype(out_dtype).itemsize
    est = (2 * tm * tk * in_b          # patch tiles (double-buffered)
           + 2 * tk * tn * in_b        # weight tiles
           + 2 * tm * tn * out_b       # output tiles
           + tm * tn * 4               # accumulator scratch
           + 2 * 2 * tn * 4)           # scale + bias
    vmem_ceiling = (vmem_cap * 3) // 4  # ~48 MiB on v7x, ~96 MiB on v5e/v6e
    vmem_limit = int(min(vmem_ceiling, max(2 * est, 32 * 1024 * 1024)))

    kernel = functools.partial(_matmul_bn_act_kernel, activation=activation)
    out = pl.pallas_call(
        kernel,
        out_shape=jax.ShapeDtypeStruct((m_pad, cout_pad), out_dtype),
        grid_spec=pltpu.PrefetchScalarGridSpec(
            num_scalar_prefetch=0,
            grid=grid,
            in_specs=[
                pl.BlockSpec((tm, tk), lambda i, j, kq: (i, kq)),
                pl.BlockSpec((tk, tn), lambda i, j, kq: (kq, j)),
                pl.BlockSpec((1, tn), lambda i, j, kq: (0, j)),
                pl.BlockSpec((1, tn), lambda i, j, kq: (0, j)),
            ],
            out_specs=pl.BlockSpec((tm, tn), lambda i, j, kq: (i, j)),
            scratch_shapes=[pltpu.VMEM((tm, tn), jnp.float32)],
        ),
        compiler_params=pltpu.CompilerParams(
            dimension_semantics=("parallel", "parallel", "arbitrary"),
            vmem_limit_bytes=vmem_limit),
    )(patches, w_mat, scale, bias)

    out = out[:m, :cout].reshape(n, oh, ow, cout)   # drop M / Cout padding
    if nhwc_out:
        return out
    return jnp.transpose(out, (0, 3, 1, 2))         # back to NCHW (PyTorch parity)


if __name__ == "__main__":
    key = jax.random.PRNGKey(0)
    k_x, k_w, k_b, k_g, k_be, k_m, k_v = jax.random.split(key, 7)

    # Module hyper-params (synthetic): Conv2d(4, 8, k=3, s=1, p=1)
    N, CIN, H, W = 2, 4, 16, 16
    COUT, K, S, P = 8, 3, 1, 1

    x = jax.random.normal(k_x, (N, CIN, H, W), jnp.float32)
    weight = jax.random.normal(k_w, (COUT, CIN, K, K), jnp.float32) * 0.1
    conv_bias = jax.random.normal(k_b, (COUT,), jnp.float32) * 0.1
    gamma = 1.0 + 0.1 * jax.random.normal(k_g, (COUT,), jnp.float32)
    beta = 0.1 * jax.random.normal(k_be, (COUT,), jnp.float32)
    running_mean = 0.1 * jax.random.normal(k_m, (COUT,), jnp.float32)
    running_var = jnp.abs(1.0 + 0.1 * jax.random.normal(k_v, (COUT,), jnp.float32))

    out = conv2d_bn_relu(x, weight, conv_bias, gamma, beta, running_mean,
                         running_var, k=K, s=S, p=P,
                         activation=True, batch_norm=True)
    out = jax.block_until_ready(out)

    # Reference in plain JAX.  The kernel feeds bf16 patches/weights to the MXU
    # (f32 accumulation), so the reference conv uses the same bf16-cast inputs.
    ref = jax.lax.conv_general_dilated(
        x.astype(jnp.bfloat16), weight.astype(jnp.bfloat16),
        window_strides=(S, S), padding=[(P, P), (P, P)],
        dimension_numbers=("NCHW", "OIHW", "NCHW"),
        preferred_element_type=jnp.float32)
    ref = ref + conv_bias[None, :, None, None]
    ref = (ref - running_mean[None, :, None, None]) / jnp.sqrt(
        running_var[None, :, None, None] + 1e-5)
    ref = ref * gamma[None, :, None, None] + beta[None, :, None, None]
    ref = jnp.maximum(ref, 0.0)

    assert out.shape == (N, COUT, H, W)
    assert jnp.allclose(out, ref, atol=5e-3, rtol=5e-3)
    print("KERNEL_OK")
</pallas_src>

<mosaic_0001>
module attributes {stable_mosaic.version = 11 : i64} {
  func.func @_matmul_bn_act_kernel(%arg0: i32, %arg1: i32, %arg2: i32, %arg3: memref<512x36xbf16, #tpu.memory_space<vmem>>, %arg4: memref<36x128xbf16, #tpu.memory_space<vmem>>, %arg5: memref<1x128xf32, #tpu.memory_space<vmem>>, %arg6: memref<1x128xf32, #tpu.memory_space<vmem>>, %arg7: memref<512x128xf32, #tpu.memory_space<vmem>>, %arg8: memref<512x128xf32, #tpu.memory_space<vmem>>) attributes {dimension_semantics = [#tpu.dimension_semantics<parallel>, #tpu.dimension_semantics<parallel>, #tpu.dimension_semantics<arbitrary>], iteration_bounds = array<i64: 1, 1, 1>, scalar_prefetch = 0 : i64, scratch_operands = 1 : i64, tpu.core_type = #tpu.core_type<tc>, window_params = [{transform_indices = @transform_0, window_bounds = array<i64: 512, 36>}, {transform_indices = @transform_1, window_bounds = array<i64: 36, 128>}, {transform_indices = @transform_2, window_bounds = array<i64: 1, 128>}, {transform_indices = @transform_3, window_bounds = array<i64: 1, 128>}, {transform_indices = @transform_4, window_bounds = array<i64: 512, 128>}]} {
    %c0_i32 = arith.constant 0 : i32
    %0 = arith.cmpi eq, %arg2, %c0_i32 : i32
    %1 = arith.extui %0 : i1 to i32
    %c0_i32_0 = arith.constant 0 : i32
    %2 = arith.cmpi ne, %1, %c0_i32_0 : i32
    scf.if %2 {
      %cst_10 = arith.constant 0.000000e+00 : f32
      %12 = vector.broadcast %cst_10 : f32 to vector<512x128xf32>
      %c0_11 = arith.constant 0 : index
      %c0_12 = arith.constant 0 : index
      %13 = vector.load %arg8[%c0_11, %c0_12] : memref<512x128xf32, #tpu.memory_space<vmem>>, vector<512x128xf32>
      tpu.vector_store %arg8[%c0_11, %c0_12], %12 {strides = array<i32>} : memref<512x128xf32, #tpu.memory_space<vmem>>, vector<512x128xf32>,
    } else {
    }
    %c0 = arith.constant 0 : index
    %c0_1 = arith.constant 0 : index
    %3 = vector.load %arg8[%c0, %c0_1] : memref<512x128xf32, #tpu.memory_space<vmem>>, vector<512x128xf32>
    %c0_2 = arith.constant 0 : index
    %c0_3 = arith.constant 0 : index
    %4 = vector.load %arg3[%c0_2, %c0_3] : memref<512x36xbf16, #tpu.memory_space<vmem>>, vector<512x36xbf16>
    %c0_4 = arith.constant 0 : index
    %c0_5 = arith.constant 0 : index
    %5 = vector.load %arg4[%c0_4, %c0_5] : memref<36x128xbf16, #tpu.memory_space<vmem>>, vector<36x128xbf16>
    %cst = arith.constant dense<0.000000e+00> : vector<512x128xf32>
    %6 = tpu.matmul %4, %5, %cst {dimension_numbers = #tpu.dot_dimension_numbers<[1], [0], [0], [1], [0, 0, 1, 1], [], []>} : vector<512x36xbf16>, vector<36x128xbf16>, vector<512x128xf32> -> vector<512x128xf32>
    %7 = arith.addf %3, %6 : vector<512x128xf32>
    %c0_6 = arith.constant 0 : index
    %c0_7 = arith.constant 0 : index
    %8 = vector.load %arg8[%c0_6, %c0_7] : memref<512x128xf32, #tpu.memory_space<vmem>>, vector<512x128xf32>
    tpu.vector_store %arg8[%c0_6, %c0_7], %7 {strides = array<i32>} : memref<512x128xf32, #tpu.memory_space<vmem>>, vector<512x128xf32>,
    %c0_i32_8 = arith.constant 0 : i32
    %9 = arith.cmpi eq, %arg2, %c0_i32_8 : i32
    %10 = arith.extui %9 : i1 to i32
    %c0_i32_9 = arith.constant 0 : i32
    %11 = arith.cmpi ne, %10, %c0_i32_9 : i32
    scf.if %11 {
      %c0_10 = arith.constant 0 : index
      %c0_11 = arith.constant 0 : index
      %12 = vector.load %arg8[%c0_10, %c0_11] : memref<512x128xf32, #tpu.memory_space<vmem>>, vector<512x128xf32>
      %c0_12 = arith.constant 0 : index
      %c0_13 = arith.constant 0 : index
      %13 = vector.load %arg5[%c0_12, %c0_13] : memref<1x128xf32, #tpu.memory_space<vmem>>, vector<1x128xf32>
      %14 = vector.broadcast %13 : vector<1x128xf32> to vector<512x128xf32>
      %15 = arith.mulf %12, %14 : vector<512x128xf32>
      %c0_14 = arith.constant 0 : index
      %c0_15 = arith.constant 0 : index
      %16 = vector.load %arg6[%c0_14, %c0_15] : memref<1x128xf32, #tpu.memory_space<vmem>>, vector<1x128xf32>
      %17 = vector.broadcast %16 : vector<1x128xf32> to vector<512x128xf32>
      %18 = arith.addf %15, %17 : vector<512x128xf32>
      %cst_16 = arith.constant 0.000000e+00 : f32
      %19 = vector.broadcast %cst_16 : f32 to vector<512x128xf32>
      %20 = arith.maximumf %18, %19 : vector<512x128xf32>
      %c0_17 = arith.constant 0 : index
      %c0_18 = arith.constant 0 : index
      %21 = vector.load %arg7[%c0_17, %c0_18] : memref<512x128xf32, #tpu.memory_space<vmem>>, vector<512x128xf32>
      tpu.vector_store %arg7[%c0_17, %c0_18], %20 {strides = array<i32>} : memref<512x128xf32, #tpu.memory_space<vmem>>, vector<512x128xf32>,
    } else {
    }
    return
  }
  func.func @transform_0(%arg0: i32, %arg1: i32, %arg2: i32) -> (i32, i32) {
    %c0_i32 = arith.constant 0 : i32
    return %arg0, %arg2 : i32, i32
  }
  func.func @transform_1(%arg0: i32, %arg1: i32, %arg2: i32) -> (i32, i32) {
    %c0_i32 = arith.constant 0 : i32
    return %arg2, %arg1 : i32, i32
  }
  func.func @transform_2(%arg0: i32, %arg1: i32, %arg2: i32) -> (i32, i32) {
    %c0_i32 = arith.constant 0 : i32
    %c0_i32_0 = arith.constant 0 : i32
    return %c0_i32, %arg1 : i32, i32
  }
  func.func @transform_3(%arg0: i32, %arg1: i32, %arg2: i32) -> (i32, i32) {
    %c0_i32 = arith.constant 0 : i32
    %c0_i32_0 = arith.constant 0 : i32
    return %c0_i32, %arg1 : i32, i32
  }
  func.func @transform_4(%arg0: i32, %arg1: i32, %arg2: i32) -> (i32, i32) {
    %c0_i32 = arith.constant 0 : i32
    return %arg0, %arg1 : i32, i32
  }
}

</mosaic_0001>

<llo_original>
// kernel: tpu_custom_call.1
$region0: #{tpu_custom_call.1}
  #allocation0 [shape = 'u32[]', space=smem, size = 0x4, offset = 0x4, fixed_abs, tag = 'smem constant byte address 0x4 - core index']
  #allocation1 [shape = 'u32[72,128]{1,0:T(1,128)}', space=vmem, size = 0x9000, scoped, tag = 'internal scratch']
  #allocation2 [shape = 'f32[512,128]{1,0:T(8,128)}', space=vmem, size = 0x40000, scoped, tag = 'scratch operand']
  %s0 = inlined_call_operand.vmem [shape: bf16[512,36], index: 0, kind: input, shape index: {}]
  %s1 = inlined_call_operand.vmem [shape: bf16[36,128], index: 1, kind: input, shape index: {}]
  %s2 = inlined_call_operand.vmem [shape: f32[1,128], index: 2, kind: input, shape index: {}]
  %s3 = inlined_call_operand.vmem [shape: f32[1,128], index: 3, kind: input, shape index: {}]
  %s4 = inlined_call_operand.hbm [shape: f32[512,128], index: 4, kind: output, shape index: {}]
  %s5 = sld [smem:[#allocation0]]
  $region34: #{tpu_custom_call.1} parent=0
    _
  %s7 = ssub.s32 1, %s5
  %s8 = scalar_select 0, %s7, %s5
  $region1: #{tpu_custom_call.1} parent=0
    #allocation3 [shape = 'u8[262144]{0}', space=vmem, size = 0x40000, scoped, tag = 'output window, operand 0, single buffered']
    #allocation4 [shape = 's32[1]{0}', space=sflag, size = 0x4, scoped, tag = 'scoped memory for tpu_custom_call.1']
    %9 = vsyncpa [#allocation4], 0
    // Predicated region
    $region2: #{tpu_custom_call.1} parent=1 // pred_check
      _
    $region3: #{tpu_custom_call.1} parent=1 // pred_check_branch
      %11 = sbr.rel (0) target = $region5
    $region4: #{tpu_custom_call.1} parent=1 // pred_region
      _
    $region5: #{tpu_custom_call.1} parent=1 // pred_fallthru
      _
    // Predicated region
    $region6: #{tpu_custom_call.1} parent=1 // pred_check
      _
    $region7: #{tpu_custom_call.1} parent=1 // pred_check_branch
      %13 = sbr.rel (0) target = $region9
    $region8: #{tpu_custom_call.1} parent=1 // pred_region
      _
    $region9: #{tpu_custom_call.1} parent=1 // pred_fallthru
      _
    // Predicated region
    $region10: #{tpu_custom_call.1} parent=1 // pred_check
      _
    $region11: #{tpu_custom_call.1} parent=1 // pred_check_branch
      %15 = sbr.rel (0) target = $region13
    $region12: #{tpu_custom_call.1} parent=1 // pred_region
      _
    $region13: #{tpu_custom_call.1} parent=1 // pred_fallthru
      _
    // Predicated region
    $region14: #{tpu_custom_call.1} parent=1 // pred_check
      _
    $region15: #{tpu_custom_call.1} parent=1 // pred_check_branch
      %17 = sbr.rel (0) target = $region17
    $region16: #{tpu_custom_call.1} parent=1 // pred_region
      _
    $region17: #{tpu_custom_call.1} parent=1 // pred_fallthru
      _
    %p19 = scmp.eq.s32.totalorder 0, 0
    // Predicated region
    $region18: #{tpu_custom_call.1} parent=1 // pred_check
      %p20 = pneg %p19
    $region19: #{tpu_custom_call.1} parent=1 // pred_check_branch
      %22 = sbr.rel (%p20) target = $region21
    $region20: #{tpu_custom_call.1} parent=1 // pred_region
      %23 = vst [vmem:[#allocation2] sm:$0xff] 0.0
      %24 = vst [vmem:[#allocation2 + $0x8] sm:$0xff] 0.0
      %25 = vst [vmem:[#allocation2 + $0x10] sm:$0xff] 0.0
      %26 = vst [vmem:[#allocation2 + $0x18] sm:$0xff] 0.0
      %27 = vst [vmem:[#allocation2 + $0x20] sm:$0xff] 0.0
      %28 = vst [vmem:[#allocation2 + $0x28] sm:$0xff] 0.0
      %29 = vst [vmem:[#allocation2 + $0x30] sm:$0xff] 0.0
      %30 = vst [vmem:[#allocation2 + $0x38] sm:$0xff] 0.0
      %31 = vst [vmem:[#allocation2 + $0x40] sm:$0xff] 0.0
      %32 = vst [vmem:[#allocation2 + $0x48] sm:$0xff] 0.0
      %33 = vst [vmem:[#allocation2 + $0x50] sm:$0xff] 0.0
      %34 = vst [vmem:[#allocation2 + $0x58] sm:$0xff] 0.0
      %35 = vst [vmem:[#allocation2 + $0x60] sm:$0xff] 0.0
      %36 = vst [vmem:[#allocation2 + $0x68] sm:$0xff] 0.0
      %37 = vst [vmem:[#allocation2 + $0x70] sm:$0xff] 0.0
      %38 = vst [vmem:[#allocation2 + $0x78] sm:$0xff] 0.0
      %39 = vst [vmem:[#allocation2 + $0x80] sm:$0xff] 0.0
      %40 = vst [vmem:[#allocation2 + $0x88] sm:$0xff] 0.0
      %41 = vst [vmem:[#allocation2 + $0x90] sm:$0xff] 0.0
      %42 = vst [vmem:[#allocation2 + $0x98] sm:$0xff] 0.0
      %43 = vst [vmem:[#allocation2 + $0xa0] sm:$0xff] 0.0
      %44 = vst [vmem:[#allocation2 + $0xa8] sm:$0xff] 0.0
      %45 = vst [vmem:[#allocation2 + $0xb0] sm:$0xff] 0.0
      %46 = vst [vmem:[#allocation2 + $0xb8] sm:$0xff] 0.0
      %47 = vst [vmem:[#allocation2 + $0xc0] sm:$0xff] 0.0
      %48 = vst [vmem:[#allocation2 + $0xc8] sm:$0xff] 0.0
      %49 = vst [vmem:[#allocation2 + $0xd0] sm:$0xff] 0.0
      %50 = vst [vmem:[#allocation2 + $0xd8] sm:$0xff] 0.0
      %51 = vst [vmem:[#allocation2 + $0xe0] sm:$0xff] 0.0
      %52 = vst [vmem:[#allocation2 + $0xe8] sm:$0xff] 0.0
      %53 = vst [vmem:[#allocation2 + $0xf0] sm:$0xff] 0.0
      %54 = vst [vmem:[#allocation2 + $0xf8] sm:$0xff] 0.0
      %55 = vst [vmem:[#allocation2 + $0x100] sm:$0xff] 0.0
      %56 = vst [vmem:[#allocation2 + $0x108] sm:$0xff] 0.0
      %57 = vst [vmem:[#allocation2 + $0x110] sm:$0xff] 0.0
      %58 = vst [vmem:[#allocation2 + $0x118] sm:$0xff] 0.0
      %59 = vst [vmem:[#allocation2 + $0x120] sm:$0xff] 0.0
      %60 = vst [vmem:[#allocation2 + $0x128] sm:$0xff] 0.0
      %61 = vst [vmem:[#allocation2 + $0x130] sm:$0xff] 0.0
      %62 = vst [vmem:[#allocation2 + $0x138] sm:$0xff] 0.0
      %63 = vst [vmem:[#allocation2 + $0x140] sm:$0xff] 0.0
      %64 = vst [vmem:[#allocation2 + $0x148] sm:$0xff] 0.0
      %65 = vst [vmem:[#allocation2 + $0x150] sm:$0xff] 0.0
      %66 = vst [vmem:[#allocation2 + $0x158] sm:$0xff] 0.0
      %67 = vst [vmem:[#allocation2 + $0x160] sm:$0xff] 0.0
      %68 = vst [vmem:[#allocation2 + $0x168] sm:$0xff] 0.0
      %69 = vst [vmem:[#allocation2 + $0x170] sm:$0xff] 0.0
      %70 = vst [vmem:[#allocation2 + $0x178] sm:$0xff] 0.0
      %71 = vst [vmem:[#allocation2 + $0x180] sm:$0xff] 0.0
      %72 = vst [vmem:[#allocation2 + $0x188] sm:$0xff] 0.0
      %73 = vst [vmem:[#allocation2 + $0x190] sm:$0xff] 0.0
      %74 = vst [vmem:[#allocation2 + $0x198] sm:$0xff] 0.0
      %75 = vst [vmem:[#allocation2 + $0x1a0] sm:$0xff] 0.0
      %76 = vst [vmem:[#allocation2 + $0x1a8] sm:$0xff] 0.0
      %77 = vst [vmem:[#allocation2 + $0x1b0] sm:$0xff] 0.0
      %78 = vst [vmem:[#allocation2 + $0x1b8] sm:$0xff] 0.0
      %79 = vst [vmem:[#allocation2 + $0x1c0] sm:$0xff] 0.0
      %80 = vst [vmem:[#allocation2 + $0x1c8] sm:$0xff] 0.0
      %81 = vst [vmem:[#allocation2 + $0x1d0] sm:$0xff] 0.0
      %82 = vst [vmem:[#allocation2 + $0x1d8] sm:$0xff] 0.0
      %83 = vst [vmem:[#allocation2 + $0x1e0] sm:$0xff] 0.0
      %84 = vst [vmem:[#allocation2 + $0x1e8] sm:$0xff] 0.0
      %85 = vst [vmem:[#allocation2 + $0x1f0] sm:$0xff] 0.0
      %86 = vst [vmem:[#allocation2 + $0x1f8] sm:$0xff] 0.0
    $region21: #{tpu_custom_call.1} parent=1 // pred_fallthru
      _
    %v87 = vld [vmem:[#allocation2] sm:$0xff]
    %v88 = vld [vmem:[#allocation2 + $0x8] sm:$0xff]
    %v89 = vld [vmem:[#allocation2 + $0x10] sm:$0xff]
    %v90 = vld [vmem:[#allocation2 + $0x18] sm:$0xff]
    %v91 = vld [vmem:[#allocation2 + $0x20] sm:$0xff]
    %v92 = vld [vmem:[#allocation2 + $0x28] sm:$0xff]
    %v93 = vld [vmem:[#allocation2 + $0x30] sm:$0xff]
    %v94 = vld [vmem:[#allocation2 + $0x38] sm:$0xff]
    %v95 = vld [vmem:[#allocation2 + $0x40] sm:$0xff]
    %v96 = vld [vmem:[#allocation2 + $0x48] sm:$0xff]
    %v97 = vld [vmem:[#allocation2 + $0x50] sm:$0xff]
    %v98 = vld [vmem:[#allocation2 + $0x58] sm:$0xff]
    %v99 = vld [vmem:[#allocation2 + $0x60] sm:$0xff]
    %v100 = vld [vmem:[#allocation2 + $0x68] sm:$0xff]
    %v101 = vld [vmem:[#allocation2 + $0x70] sm:$0xff]
    %v102 = vld [vmem:[#allocation2 + $0x78] sm:$0xff]
    %v103 = vld [vmem:[#allocation2 + $0x80] sm:$0xff]
    %v104 = vld [vmem:[#allocation2 + $0x88] sm:$0xff]
    %v105 = vld [vmem:[#allocation2 + $0x90] sm:$0xff]
    %v106 = vld [vmem:[#allocation2 + $0x98] sm:$0xff]
    %v107 = vld [vmem:[#allocation2 + $0xa0] sm:$0xff]
    %v108 = vld [vmem:[#allocation2 + $0xa8] sm:$0xff]
    %v109 = vld [vmem:[#allocation2 + $0xb0] sm:$0xff]
    %v110 = vld [vmem:[#allocation2 + $0xb8] sm:$0xff]
    %v111 = vld [vmem:[#allocation2 + $0xc0] sm:$0xff]
    %v112 = vld [vmem:[#allocation2 + $0xc8] sm:$0xff]
    %v113 = vld [vmem:[#allocation2 + $0xd0] sm:$0xff]
    %v114 = vld [vmem:[#allocation2 + $0xd8] sm:$0xff]
    %v115 = vld [vmem:[#allocation2 + $0xe0] sm:$0xff]
    %v116 = vld [vmem:[#allocation2 + $0xe8] sm:$0xff]
    %v117 = vld [vmem:[#allocation2 + $0xf0] sm:$0xff]
    %v118 = vld [vmem:[#allocation2 + $0xf8] sm:$0xff]
    %v119 = vld [vmem:[#allocation2 + $0x100] sm:$0xff]
    %v120 = vld [vmem:[#allocation2 + $0x108] sm:$0xff]
    %v121 = vld [vmem:[#allocation2 + $0x110] sm:$0xff]
    %v122 = vld [vmem:[#allocation2 + $0x118] sm:$0xff]
    %v123 = vld [vmem:[#allocation2 + $0x120] sm:$0xff]
    %v124 = vld [vmem:[#allocation2 + $0x128] sm:$0xff]
    %v125 = vld [vmem:[#allocation2 + $0x130] sm:$0xff]
    %v126 = vld [vmem:[#allocation2 + $0x138] sm:$0xff]
    %v127 = vld [vmem:[#allocation2 + $0x140] sm:$0xff]
    %v128 = vld [vmem:[#allocation2 + $0x148] sm:$0xff]
    %v129 = vld [vmem:[#allocation2 + $0x150] sm:$0xff]
    %v130 = vld [vmem:[#allocation2 + $0x158] sm:$0xff]
    %v131 = vld [vmem:[#allocation2 + $0x160] sm:$0xff]
    %v132 = vld [vmem:[#allocation2 + $0x168] sm:$0xff]
    %v133 = vld [vmem:[#allocation2 + $0x170] sm:$0xff]
    %v134 = vld [vmem:[#allocation2 + $0x178] sm:$0xff]
    %v135 = vld [vmem:[#allocation2 + $0x180] sm:$0xff]
    %v136 = vld [vmem:[#allocation2 + $0x188] sm:$0xff]
    %v137 = vld [vmem:[#allocation2 + $0x190] sm:$0xff]
    %v138 = vld [vmem:[#allocation2 + $0x198] sm:$0xff]
    %v139 = vld [vmem:[#allocation2 + $0x1a0] sm:$0xff]
    %v140 = vld [vmem:[#allocation2 + $0x1a8] sm:$0xff]
    %v141 = vld [vmem:[#allocation2 + $0x1b0] sm:$0xff]
    %v142 = vld [vmem:[#allocation2 + $0x1b8] sm:$0xff]
    %v143 = vld [vmem:[#allocation2 + $0x1c0] sm:$0xff]
    %v144 = vld [vmem:[#allocation2 + $0x1c8] sm:$0xff]
    %v145 = vld [vmem:[#allocation2 + $0x1d0] sm:$0xff]
    %v146 = vld [vmem:[#allocation2 + $0x1d8] sm:$0xff]
    %v147 = vld [vmem:[#allocation2 + $0x1e0] sm:$0xff]
    %v148 = vld [vmem:[#allocation2 + $0x1e8] sm:$0xff]
    %v149 = vld [vmem:[#allocation2 + $0x1f0] sm:$0xff]
    %v150 = vld [vmem:[#allocation2 + $0x1f8] sm:$0xff]
    %v151 = vld [vmem:[%s0] sm:$0xf]
    %v152 = vld [vmem:[%s0 + $0x4] sm:$0xf]
    %v153 = vld [vmem:[%s0 + $0x8] sm:$0xf]
    %v154 = vld [vmem:[%s0 + $0xc] sm:$0xf]
    %v155 = vld [vmem:[%s0 + $0x10] sm:$0xf]
    %v156 = vld [vmem:[%s0 + $0x14] sm:$0xf]
    %v157 = vld [vmem:[%s0 + $0x18] sm:$0xf]
    %v158 = vld [vmem:[%s0 + $0x1c] sm:$0xf]
    %v159 = vld [vmem:[%s0 + $0x20] sm:$0xf]
    %v160 = vld [vmem:[%s0 + $0x24] sm:$0xf]
    %v161 = vld [vmem:[%s0 + $0x28] sm:$0xf]
    %v162 = vld [vmem:[%s0 + $0x2c] sm:$0xf]
    %v163 = vld [vmem:[%s0 + $0x30] sm:$0xf]
    %v164 = vld [vmem:[%s0 + $0x34] sm:$0xf]
    %v165 = vld [vmem:[%s0 + $0x38] sm:$0xf]
    %v166 = vld [vmem:[%s0 + $0x3c] sm:$0xf]
    %v167 = vld [vmem:[%s0 + $0x40] sm:$0xf]
    %v168 = vld [vmem:[%s0 + $0x44] sm:$0xf]
    %v169 = vld [vmem:[%s0 + $0x48] sm:$0xf]
    %v170 = vld [vmem:[%s0 + $0x4c] sm:$0xf]
    %v171 = vld [vmem:[%s0 + $0x50] sm:$0xf]
    %v172 = vld [vmem:[%s0 + $0x54] sm:$0xf]
    %v173 = vld [vmem:[%s0 + $0x58] sm:$0xf]
    %v174 = vld [vmem:[%s0 + $0x5c] sm:$0xf]
    %v175 = vld [vmem:[%s0 + $0x60] sm:$0xf]
    %v176 = vld [vmem:[%s0 + $0x64] sm:$0xf]
    %v177 = vld [vmem:[%s0 + $0x68] sm:$0xf]
    %v178 = vld [vmem:[%s0 + $0x6c] sm:$0xf]
    %v179 = vld [vmem:[%s0 + $0x70] sm:$0xf]
    %v180 = vld [vmem:[%s0 + $0x74] sm:$0xf]
    %v181 = vld [vmem:[%s0 + $0x78] sm:$0xf]
    %v182 = vld [vmem:[%s0 + $0x7c] sm:$0xf]
    %v183 = vld [vmem:[%s0 + $0x80] sm:$0xf]
    %v184 = vld [vmem:[%s0 + $0x84] sm:$0xf]
    %v185 = vld [vmem:[%s0 + $0x88] sm:$0xf]
    %v186 = vld [vmem:[%s0 + $0x8c] sm:$0xf]
    %v187 = vld [vmem:[%s0 + $0x90] sm:$0xf]
    %v188 = vld [vmem:[%s0 + $0x94] sm:$0xf]
    %v189 = vld [vmem:[%s0 + $0x98] sm:$0xf]
    %v190 = vld [vmem:[%s0 + $0x9c] sm:$0xf]
    %v191 = vld [vmem:[%s0 + $0xa0] sm:$0xf]
    %v192 = vld [vmem:[%s0 + $0xa4] sm:$0xf]
    %v193 = vld [vmem:[%s0 + $0xa8] sm:$0xf]
    %v194 = vld [vmem:[%s0 + $0xac] sm:$0xf]
    %v195 = vld [vmem:[%s0 + $0xb0] sm:$0xf]
    %v196 = vld [vmem:[%s0 + $0xb4] sm:$0xf]
    %v197 = vld [vmem:[%s0 + $0xb8] sm:$0xf]
    %v198 = vld [vmem:[%s0 + $0xbc] sm:$0xf]
    %v199 = vld [vmem:[%s0 + $0xc0] sm:$0xf]
    %v200 = vld [vmem:[%s0 + $0xc4] sm:$0xf]
    %v201 = vld [vmem:[%s0 + $0xc8] sm:$0xf]
    %v202 = vld [vmem:[%s0 + $0xcc] sm:$0xf]
    %v203 = vld [vmem:[%s0 + $0xd0] sm:$0xf]
    %v204 = vld [vmem:[%s0 + $0xd4] sm:$0xf]
    %v205 = vld [vmem:[%s0 + $0xd8] sm:$0xf]
    %v206 = vld [vmem:[%s0 + $0xdc] sm:$0xf]
    %v207 = vld [vmem:[%s0 + $0xe0] sm:$0xf]
    %v208 = vld [vmem:[%s0 + $0xe4] sm:$0xf]
    %v209 = vld [vmem:[%s0 + $0xe8] sm:$0xf]
    %v210 = vld [vmem:[%s0 + $0xec] sm:$0xf]
    %v211 = vld [vmem:[%s0 + $0xf0] sm:$0xf]
    %v212 = vld [vmem:[%s0 + $0xf4] sm:$0xf]
    %v213 = vld [vmem:[%s0 + $0xf8] sm:$0xf]
    %v214 = vld [vmem:[%s0 + $0xfc] sm:$0xf]
    %v215 = vld [vmem:[%s1] sm:$0xf]
    %v216 = vld [vmem:[%s1 + $0x4] sm:$0xf]
    %v217 = vld [vmem:[%s1 + $0x8] sm:$0xf]
    %v218 = vld [vmem:[%s1 + $0xc] sm:$0xf]
    %v219 = vld [vmem:[%s1 + $0x10] sm:$0x3]
    %v284 = vunpack.c.l.b16 %v151
    %v285 = vunpack.c.l.b16 %v152
    %v286 = vunpack.c.l.b16 %v153
    %v287 = vunpack.c.l.b16 %v154
    %v288 = vunpack.c.l.b16 %v155
    %v289 = vunpack.c.l.b16 %v156
    %v290 = vunpack.c.l.b16 %v157
    %v291 = vunpack.c.l.b16 %v158
    %v292 = vunpack.c.l.b16 %v159
    %v293 = vunpack.c.l.b16 %v160
    %v294 = vunpack.c.l.b16 %v161
    %v295 = vunpack.c.l.b16 %v162
    %v296 = vunpack.c.l.b16 %v163
    %v297 = vunpack.c.l.b16 %v164
    %v298 = vunpack.c.l.b16 %v165
    %v299 = vunpack.c.l.b16 %v166
    %v300 = vunpack.c.l.b16 %v167
    %v301 = vunpack.c.l.b16 %v168
    %v302 = vunpack.c.l.b16 %v169
    %v303 = vunpack.c.l.b16 %v170
    %v304 = vunpack.c.l.b16 %v171
    %v305 = vunpack.c.l.b16 %v172
    %v306 = vunpack.c.l.b16 %v173
    %v307 = vunpack.c.l.b16 %v174
    %v308 = vunpack.c.l.b16 %v175
    %v309 = vunpack.c.l.b16 %v176
    %v310 = vunpack.c.l.b16 %v177
    %v311 = vunpack.c.l.b16 %v178
    %v312 = vunpack.c.l.b16 %v179
    %v313 = vunpack.c.l.b16 %v180
    %v314 = vunpack.c.l.b16 %v181
    %v315 = vunpack.c.l.b16 %v182
    %v316 = vunpack.c.l.b16 %v183
    %v317 = vunpack.c.l.b16 %v184
    %v318 = vunpack.c.l.b16 %v185
    %v319 = vunpack.c.l.b16 %v186
    %v320 = vunpack.c.l.b16 %v187
    %v321 = vunpack.c.l.b16 %v188
    %v322 = vunpack.c.l.b16 %v189
    %v323 = vunpack.c.l.b16 %v190
    %v324 = vunpack.c.l.b16 %v191
    %v325 = vunpack.c.l.b16 %v192
    %v326 = vunpack.c.l.b16 %v193
    %v327 = vunpack.c.l.b16 %v194
    %v328 = vunpack.c.l.b16 %v195
    %v329 = vunpack.c.l.b16 %v196
    %v330 = vunpack.c.l.b16 %v197
    %v331 = vunpack.c.l.b16 %v198
    %v332 = vunpack.c.l.b16 %v199
    %v333 = vunpack.c.l.b16 %v200
    %v334 = vunpack.c.l.b16 %v201
    %v335 = vunpack.c.l.b16 %v202
    %v336 = vunpack.c.l.b16 %v203
    %v337 = vunpack.c.l.b16 %v204
    %v338 = vunpack.c.l.b16 %v205
    %v339 = vunpack.c.l.b16 %v206
    %v340 = vunpack.c.l.b16 %v207
    %v341 = vunpack.c.l.b16 %v208
    %v342 = vunpack.c.l.b16 %v209
    %v343 = vunpack.c.l.b16 %v210
    %v344 = vunpack.c.l.b16 %v211
    %v345 = vunpack.c.l.b16 %v212
    %v346 = vunpack.c.l.b16 %v213
    %v347 = vunpack.c.l.b16 %v214
    %v348 = vpack.c.b16 %v285, %v284
    %v349 = vpack.c.b16 %v287, %v286
    %v350 = vpack.c.b16 %v289, %v288
    %v351 = vpack.c.b16 %v291, %v290
    %v352 = vpack.c.b16 %v293, %v292
    %v353 = vpack.c.b16 %v295, %v294
    %v354 = vpack.c.b16 %v297, %v296
    %v355 = vpack.c.b16 %v299, %v298
    %v356 = vpack.c.b16 %v301, %v300
    %v357 = vpack.c.b16 %v303, %v302
    %v358 = vpack.c.b16 %v305, %v304
    %v359 = vpack.c.b16 %v307, %v306
    %v360 = vpack.c.b16 %v309, %v308
    %v361 = vpack.c.b16 %v311, %v310
    %v362 = vpack.c.b16 %v313, %v312
    %v363 = vpack.c.b16 %v315, %v314
    %v364 = vpack.c.b16 %v317, %v316
    %v365 = vpack.c.b16 %v319, %v318
    %v366 = vpack.c.b16 %v321, %v320
    %v367 = vpack.c.b16 %v323, %v322
    %v368 = vpack.c.b16 %v325, %v324
    %v369 = vpack.c.b16 %v327, %v326
    %v370 = vpack.c.b16 %v329, %v328
    %v371 = vpack.c.b16 %v331, %v330
    %v372 = vpack.c.b16 %v333, %v332
    %v373 = vpack.c.b16 %v335, %v334
    %v374 = vpack.c.b16 %v337, %v336
    %v375 = vpack.c.b16 %v339, %v338
    %v376 = vpack.c.b16 %v341, %v340
    %v377 = vpack.c.b16 %v343, %v342
    %v378 = vpack.c.b16 %v345, %v344
    %v379 = vpack.c.b16 %v347, %v346
    %v385 = vunpack.c.l.b16 %v215
    %v386 = vunpack.c.l.b16 %v216
    %v387 = vunpack.c.l.b16 %v217
    %v388 = vunpack.c.l.b16 %v218
    %v389 = vunpack.c.l.b16 %v219
    %v390 = vpack.c.b16 %v386, %v385
    %v391 = vpack.c.b16 %v388, %v387
    %v392 = vpack.c.b16 %v389, %v389
    %vm395 = vcmask 293888
    %v397 = vsel %vm395, %v348, 0
    %v400 = vsel %vm395, %v349, 0
    %v403 = vsel %vm395, %v350, 0
    %v406 = vsel %vm395, %v351, 0
    %v409 = vsel %vm395, %v352, 0
    %v412 = vsel %vm395, %v353, 0
    %v415 = vsel %vm395, %v354, 0
    %v418 = vsel %vm395, %v355, 0
    %v421 = vsel %vm395, %v356, 0
    %v424 = vsel %vm395, %v357, 0
    %v427 = vsel %vm395, %v358, 0
    %v430 = vsel %vm395, %v359, 0
    %v433 = vsel %vm395, %v360, 0
    %v436 = vsel %vm395, %v361, 0
    %v439 = vsel %vm395, %v362, 0
    %v442 = vsel %vm395, %v363, 0
    %v445 = vsel %vm395, %v364, 0
    %v448 = vsel %vm395, %v365, 0
    %v451 = vsel %vm395, %v366, 0
    %v454 = vsel %vm395, %v367, 0
    %v457 = vsel %vm395, %v368, 0
    %v460 = vsel %vm395, %v369, 0
    %v463 = vsel %vm395, %v370, 0
    %v466 = vsel %vm395, %v371, 0
    %v469 = vsel %vm395, %v372, 0
    %v472 = vsel %vm395, %v373, 0
    %v475 = vsel %vm395, %v374, 0
    %v478 = vsel %vm395, %v375, 0
    %v481 = vsel %vm395, %v376, 0
    %v484 = vsel %vm395, %v377, 0
    %v487 = vsel %vm395, %v378, 0
    %v490 = vsel %vm395, %v379, 0
    %vm492 = vcmask 1041408
    %v494 = vsel %vm492, %v392, 0
    %496 = vmatpush.bf16.msra.mxu0 0
    %497 = vmatpush.bf16.msra.mxu0 0
    %498 = vmatpush.bf16.msra.mxu0 0
    %499 = vmatpush.bf16.msra.mxu0 0
    %500 = vmatpush.bf16.msra.mxu0 0
    %501 = vmatpush.bf16.msra.mxu0 %v494
    %502 = vmatpush.bf16.msra.mxu0 %v391
    %503 = vmatpush.bf16.msra.mxu0 %v390
    %504 = vmatmul.bf16.gmra.mxu0 %v397
    %v505 = vpop.f32.mrf.mxu0
    %v506 = vadd.f32 0.0, %v505
    %v507 = vpop.f32.mrf.mxu0
    %v508 = vadd.f32 0.0, %v507
    %509 = vmatmul.bf16.gmra.mxu0 %v400
    %v510 = vpop.f32.mrf.mxu0
    %v511 = vadd.f32 0.0, %v510
    %v512 = vpop.f32.mrf.mxu0
    %v513 = vadd.f32 0.0, %v512
    %514 = vmatmul.bf16.gmra.mxu0 %v403
    %v515 = vpop.f32.mrf.mxu0
    %v516 = vadd.f32 0.0, %v515
    %v517 = vpop.f32.mrf.mxu0
    %v518 = vadd.f32 0.0, %v517
    %519 = vmatmul.bf16.gmra.mxu0 %v406
    %v520 = vpop.f32.mrf.mxu0
    %v521 = vadd.f32 0.0, %v520
    %v522 = vpop.f32.mrf.mxu0
    %v523 = vadd.f32 0.0, %v522
    %524 = vmatmul.bf16.gmra.mxu0 %v409
    %v525 = vpop.f32.mrf.mxu0
    %v526 = vadd.f32 0.0, %v525
    %v527 = vpop.f32.mrf.mxu0
    %v528 = vadd.f32 0.0, %v527
    %529 = vmatmul.bf16.gmra.mxu0 %v412
    %v530 = vpop.f32.mrf.mxu0
    %v531 = vadd.f32 0.0, %v530
    %v532 = vpop.f32.mrf.mxu0
    %v533 = vadd.f32 0.0, %v532
    %534 = vmatmul.bf16.gmra.mxu0 %v415
    %v535 = vpop.f32.mrf.mxu0
    %v536 = vadd.f32 0.0, %v535
    %v537 = vpop.f32.mrf.mxu0
    %v538 = vadd.f32 0.0, %v537
    %539 = vmatmul.bf16.gmra.mxu0 %v418
    %v540 = vpop.f32.mrf.mxu0
    %v541 = vadd.f32 0.0, %v540
    %v542 = vpop.f32.mrf.mxu0
    %v543 = vadd.f32 0.0, %v542
    %544 = vmatmul.bf16.gmra.mxu0 %v421
    %v545 = vpop.f32.mrf.mxu0
    %v546 = vadd.f32 0.0, %v545
    %v547 = vpop.f32.mrf.mxu0
    %v548 = vadd.f32 0.0, %v547
    %549 = vmatmul.bf16.gmra.mxu0 %v424
    %v550 = vpop.f32.mrf.mxu0
    %v551 = vadd.f32 0.0, %v550
    %v552 = vpop.f32.mrf.mxu0
    %v553 = vadd.f32 0.0, %v552
    %554 = vmatmul.bf16.gmra.mxu0 %v427
    %v555 = vpop.f32.mrf.mxu0
    %v556 = vadd.f32 0.0, %v555
    %v557 = vpop.f32.mrf.mxu0
    %v558 = vadd.f32 0.0, %v557
    %559 = vmatmul.bf16.gmra.mxu0 %v430
    %v560 = vpop.f32.mrf.mxu0
    %v561 = vadd.f32 0.0, %v560
    %v562 = vpop.f32.mrf.mxu0
    %v563 = vadd.f32 0.0, %v562
    %564 = vmatmul.bf16.gmra.mxu0 %v433
    %v565 = vpop.f32.mrf.mxu0
    %v566 = vadd.f32 0.0, %v565
    %v567 = vpop.f32.mrf.mxu0
    %v568 = vadd.f32 0.0, %v567
    %569 = vmatmul.bf16.gmra.mxu0 %v436
    %v570 = vpop.f32.mrf.mxu0
    %v571 = vadd.f32 0.0, %v570
    %v572 = vpop.f32.mrf.mxu0
    %v573 = vadd.f32 0.0, %v572
    %574 = vmatmul.bf16.gmra.mxu0 %v439
    %v575 = vpop.f32.mrf.mxu0
    %v576 = vadd.f32 0.0, %v575
    %v577 = vpop.f32.mrf.mxu0
    %v578 = vadd.f32 0.0, %v577
    %579 = vmatmul.bf16.gmra.mxu0 %v442
    %v580 = vpop.f32.mrf.mxu0
    %v581 = vadd.f32 0.0, %v580
    %v582 = vpop.f32.mrf.mxu0
    %v583 = vadd.f32 0.0, %v582
    %584 = vmatmul.bf16.gmra.mxu0 %v445
    %v585 = vpop.f32.mrf.mxu0
    %v586 = vadd.f32 0.0, %v585
    %v587 = vpop.f32.mrf.mxu0
    %v588 = vadd.f32 0.0, %v587
    %589 = vmatmul.bf16.gmra.mxu0 %v448
    %v590 = vpop.f32.mrf.mxu0
    %v591 = vadd.f32 0.0, %v590
    %v592 = vpop.f32.mrf.mxu0
    %v593 = vadd.f32 0.0, %v592
    %594 = vmatmul.bf16.gmra.mxu0 %v451
    %v595 = vpop.f32.mrf.mxu0
    %v596 = vadd.f32 0.0, %v595
    %v597 = vpop.f32.mrf.mxu0
    %v598 = vadd.f32 0.0, %v597
    %599 = vmatmul.bf16.gmra.mxu0 %v454
    %v600 = vpop.f32.mrf.mxu0
    %v601 = vadd.f32 0.0, %v600
    %v602 = vpop.f32.mrf.mxu0
    %v603 = vadd.f32 0.0, %v602
    %604 = vmatmul.bf16.gmra.mxu0 %v457
    %v605 = vpop.f32.mrf.mxu0
    %v606 = vadd.f32 0.0, %v605
    %v607 = vpop.f32.mrf.mxu0
    %v608 = vadd.f32 0.0, %v607
    %609 = vmatmul.bf16.gmra.mxu0 %v460
    %v610 = vpop.f32.mrf.mxu0
    %v611 = vadd.f32 0.0, %v610
    %v612 = vpop.f32.mrf.mxu0
    %v613 = vadd.f32 0.0, %v612
    %614 = vmatmul.bf16.gmra.mxu0 %v463
    %v615 = vpop.f32.mrf.mxu0
    %v616 = vadd.f32 0.0, %v615
    %v617 = vpop.f32.mrf.mxu0
    %v618 = vadd.f32 0.0, %v617
    %619 = vmatmul.bf16.gmra.mxu0 %v466
    %v620 = vpop.f32.mrf.mxu0
    %v621 = vadd.f32 0.0, %v620
    %v622 = vpop.f32.mrf.mxu0
    %v623 = vadd.f32 0.0, %v622
    %624 = vmatmul.bf16.gmra.mxu0 %v469
    %v625 = vpop.f32.mrf.mxu0
    %v626 = vadd.f32 0.0, %v625
    %v627 = vpop.f32.mrf.mxu0
    %v628 = vadd.f32 0.0, %v627
    %629 = vmatmul.bf16.gmra.mxu0 %v472
    %v630 = vpop.f32.mrf.mxu0
    %v631 = vadd.f32 0.0, %v630
    %v632 = vpop.f32.mrf.mxu0
    %v633 = vadd.f32 0.0, %v632
    %634 = vmatmul.bf16.gmra.mxu0 %v475
    %v635 = vpop.f32.mrf.mxu0
    %v636 = vadd.f32 0.0, %v635
    %v637 = vpop.f32.mrf.mxu0
    %v638 = vadd.f32 0.0, %v637
    %639 = vmatmul.bf16.gmra.mxu0 %v478
    %v640 = vpop.f32.mrf.mxu0
    %v641 = vadd.f32 0.0, %v640
    %v642 = vpop.f32.mrf.mxu0
    %v643 = vadd.f32 0.0, %v642
    %644 = vmatmul.bf16.gmra.mxu0 %v481
    %v645 = vpop.f32.mrf.mxu0
    %v646 = vadd.f32 0.0, %v645
    %v647 = vpop.f32.mrf.mxu0
    %v648 = vadd.f32 0.0, %v647
    %649 = vmatmul.bf16.gmra.mxu0 %v484
    %v650 = vpop.f32.mrf.mxu0
    %v651 = vadd.f32 0.0, %v650
    %v652 = vpop.f32.mrf.mxu0
    %v653 = vadd.f32 0.0, %v652
    %654 = vmatmul.bf16.gmra.mxu0 %v487
    %v655 = vpop.f32.mrf.mxu0
    %v656 = vadd.f32 0.0, %v655
    %v657 = vpop.f32.mrf.mxu0
    %v658 = vadd.f32 0.0, %v657
    %659 = vmatmul.bf16.gmra.mxu0 %v490
    %v660 = vpop.f32.mrf.mxu0
    %v661 = vadd.f32 0.0, %v660
    %v662 = vpop.f32.mrf.mxu0
    %v663 = vadd.f32 0.0, %v662
    %664 = vdwg.mxu0
    %v665 = vadd.f32 %v87, %v506
    %v666 = vadd.f32 %v88, %v508
    %v667 = vadd.f32 %v89, %v511
    %v668 = vadd.f32 %v90, %v513
    %v669 = vadd.f32 %v91, %v516
    %v670 = vadd.f32 %v92, %v518
    %v671 = vadd.f32 %v93, %v521
    %v672 = vadd.f32 %v94, %v523
    %v673 = vadd.f32 %v95, %v526
    %v674 = vadd.f32 %v96, %v528
    %v675 = vadd.f32 %v97, %v531
    %v676 = vadd.f32 %v98, %v533
    %v677 = vadd.f32 %v99, %v536
    %v678 = vadd.f32 %v100, %v538
    %v679 = vadd.f32 %v101, %v541
    %v680 = vadd.f32 %v102, %v543
    %v681 = vadd.f32 %v103, %v546
    %v682 = vadd.f32 %v104, %v548
    %v683 = vadd.f32 %v105, %v551
    %v684 = vadd.f32 %v106, %v553
    %v685 = vadd.f32 %v107, %v556
    %v686 = vadd.f32 %v108, %v558
    %v687 = vadd.f32 %v109, %v561
    %v688 = vadd.f32 %v110, %v563
    %v689 = vadd.f32 %v111, %v566
    %v690 = vadd.f32 %v112, %v568
    %v691 = vadd.f32 %v113, %v571
    %v692 = vadd.f32 %v114, %v573
    %v693 = vadd.f32 %v115, %v576
    %v694 = vadd.f32 %v116, %v578
    %v695 = vadd.f32 %v117, %v581
    %v696 = vadd.f32 %v118, %v583
    %v697 = vadd.f32 %v119, %v586
    %v698 = vadd.f32 %v120, %v588
    %v699 = vadd.f32 %v121, %v591
    %v700 = vadd.f32 %v122, %v593
    %v701 = vadd.f32 %v123, %v596
    %v702 = vadd.f32 %v124, %v598
    %v703 = vadd.f32 %v125, %v601
    %v704 = vadd.f32 %v126, %v603
    %v705 = vadd.f32 %v127, %v606
    %v706 = vadd.f32 %v128, %v608
    %v707 = vadd.f32 %v129, %v611
    %v708 = vadd.f32 %v130, %v613
    %v709 = vadd.f32 %v131, %v616
    %v710 = vadd.f32 %v132, %v618
    %v711 = vadd.f32 %v133, %v621
    %v712 = vadd.f32 %v134, %v623
    %v713 = vadd.f32 %v135, %v626
    %v714 = vadd.f32 %v136, %v628
    %v715 = vadd.f32 %v137, %v631
    %v716 = vadd.f32 %v138, %v633
    %v717 = vadd.f32 %v139, %v636
    %v718 = vadd.f32 %v140, %v638
    %v719 = vadd.f32 %v141, %v641
    %v720 = vadd.f32 %v142, %v643
    %v721 = vadd.f32 %v143, %v646
    %v722 = vadd.f32 %v144, %v648
    %v723 = vadd.f32 %v145, %v651
    %v724 = vadd.f32 %v146, %v653
    %v725 = vadd.f32 %v147, %v656
    %v726 = vadd.f32 %v148, %v658
    %v727 = vadd.f32 %v149, %v661
    %v728 = vadd.f32 %v150, %v663
    %729 = vst [vmem:[#allocation2] sm:$0xff] %v665
    %730 = vst [vmem:[#allocation2 + $0x8] sm:$0xff] %v666
    %731 = vst [vmem:[#allocation2 + $0x10] sm:$0xff] %v667
    %732 = vst [vmem:[#allocation2 + $0x18] sm:$0xff] %v668
    %733 = vst [vmem:[#allocation2 + $0x20] sm:$0xff] %v669
    %734 = vst [vmem:[#allocation2 + $0x28] sm:$0xff] %v670
    %735 = vst [vmem:[#allocation2 + $0x30] sm:$0xff] %v671
    %736 = vst [vmem:[#allocation2 + $0x38] sm:$0xff] %v672
    %737 = vst [vmem:[#allocation2 + $0x40] sm:$0xff] %v673
    %738 = vst [vmem:[#allocation2 + $0x48] sm:$0xff] %v674
    %739 = vst [vmem:[#allocation2 + $0x50] sm:$0xff] %v675
    %740 = vst [vmem:[#allocation2 + $0x58] sm:$0xff] %v676
    %741 = vst [vmem:[#allocation2 + $0x60] sm:$0xff] %v677
    %742 = vst [vmem:[#allocation2 + $0x68] sm:$0xff] %v678
    %743 = vst [vmem:[#allocation2 + $0x70] sm:$0xff] %v679
    %744 = vst [vmem:[#allocation2 + $0x78] sm:$0xff] %v680
    %745 = vst [vmem:[#allocation2 + $0x80] sm:$0xff] %v681
    %746 = vst [vmem:[#allocation2 + $0x88] sm:$0xff] %v682
    %747 = vst [vmem:[#allocation2 + $0x90] sm:$0xff] %v683
    %748 = vst [vmem:[#allocation2 + $0x98] sm:$0xff] %v684
    %749 = vst [vmem:[#allocation2 + $0xa0] sm:$0xff] %v685
    %750 = vst [vmem:[#allocation2 + $0xa8] sm:$0xff] %v686
    %751 = vst [vmem:[#allocation2 + $0xb0] sm:$0xff] %v687
    %752 = vst [vmem:[#allocation2 + $0xb8] sm:$0xff] %v688
    %753 = vst [vmem:[#allocation2 + $0xc0] sm:$0xff] %v689
    %754 = vst [vmem:[#allocation2 + $0xc8] sm:$0xff] %v690
    %755 = vst [vmem:[#allocation2 + $0xd0] sm:$0xff] %v691
    %756 = vst [vmem:[#allocation2 + $0xd8] sm:$0xff] %v692
    %757 = vst [vmem:[#allocation2 + $0xe0] sm:$0xff] %v693
    %758 = vst [vmem:[#allocation2 + $0xe8] sm:$0xff] %v694
    %759 = vst [vmem:[#allocation2 + $0xf0] sm:$0xff] %v695
    %760 = vst [vmem:[#allocation2 + $0xf8] sm:$0xff] %v696
    %761 = vst [vmem:[#allocation2 + $0x100] sm:$0xff] %v697
    %762 = vst [vmem:[#allocation2 + $0x108] sm:$0xff] %v698
    %763 = vst [vmem:[#allocation2 + $0x110] sm:$0xff] %v699
    %764 = vst [vmem:[#allocation2 + $0x118] sm:$0xff] %v700
    %765 = vst [vmem:[#allocation2 + $0x120] sm:$0xff] %v701
    %766 = vst [vmem:[#allocation2 + $0x128] sm:$0xff] %v702
    %767 = vst [vmem:[#allocation2 + $0x130] sm:$0xff] %v703
    %768 = vst [vmem:[#allocation2 + $0x138] sm:$0xff] %v704
    %769 = vst [vmem:[#allocation2 + $0x140] sm:$0xff] %v705
    %770 = vst [vmem:[#allocation2 + $0x148] sm:$0xff] %v706
    %771 = vst [vmem:[#allocation2 + $0x150] sm:$0xff] %v707
    %772 = vst [vmem:[#allocation2 + $0x158] sm:$0xff] %v708
    %773 = vst [vmem:[#allocation2 + $0x160] sm:$0xff] %v709
    %774 = vst [vmem:[#allocation2 + $0x168] sm:$0xff] %v710
    %775 = vst [vmem:[#allocation2 + $0x170] sm:$0xff] %v711
    %776 = vst [vmem:[#allocation2 + $0x178] sm:$0xff] %v712
    %777 = vst [vmem:[#allocation2 + $0x180] sm:$0xff] %v713
    %778 = vst [vmem:[#allocation2 + $0x188] sm:$0xff] %v714
    %779 = vst [vmem:[#allocation2 + $0x190] sm:$0xff] %v715
    %780 = vst [vmem:[#allocation2 + $0x198] sm:$0xff] %v716
    %781 = vst [vmem:[#allocation2 + $0x1a0] sm:$0xff] %v717
    %782 = vst [vmem:[#allocation2 + $0x1a8] sm:$0xff] %v718
    %783 = vst [vmem:[#allocation2 + $0x1b0] sm:$0xff] %v719
    %784 = vst [vmem:[#allocation2 + $0x1b8] sm:$0xff] %v720
    %785 = vst [vmem:[#allocation2 + $0x1c0] sm:$0xff] %v721
    %786 = vst [vmem:[#allocation2 + $0x1c8] sm:$0xff] %v722
    %787 = vst [vmem:[#allocation2 + $0x1d0] sm:$0xff] %v723
    %788 = vst [vmem:[#allocation2 + $0x1d8] sm:$0xff] %v724
    %789 = vst [vmem:[#allocation2 + $0x1e0] sm:$0xff] %v725
    %790 = vst [vmem:[#allocation2 + $0x1e8] sm:$0xff] %v726
    %791 = vst [vmem:[#allocation2 + $0x1f0] sm:$0xff] %v727
    %792 = vst [vmem:[#allocation2 + $0x1f8] sm:$0xff] %v728
    // Predicated region
    $region22: #{tpu_custom_call.1} parent=1 // pred_check
      %p793 = pneg %p19
    $region23: #{tpu_custom_call.1} parent=1 // pred_check_branch
      %795 = sbr.rel (%p793) target = $region25
    $region24: #{tpu_custom_call.1} parent=1 // pred_region
      %v796 = vld [vmem:[#allocation2] sm:$0xff]
      %v797 = vld [vmem:[#allocation2 + $0x8] sm:$0xff]
      %v798 = vld [vmem:[#allocation2 + $0x10] sm:$0xff]
      %v799 = vld [vmem:[#allocation2 + $0x18] sm:$0xff]
      %v800 = vld [vmem:[#allocation2 + $0x20] sm:$0xff]
      %v801 = vld [vmem:[#allocation2 + $0x28] sm:$0xff]
      %v802 = vld [vmem:[#allocation2 + $0x30] sm:$0xff]
      %v803 = vld [vmem:[#allocation2 + $0x38] sm:$0xff]
      %v804 = vld [vmem:[#allocation2 + $0x40] sm:$0xff]
      %v805 = vld [vmem:[#allocation2 + $0x48] sm:$0xff]
      %v806 = vld [vmem:[#allocation2 + $0x50] sm:$0xff]
      %v807 = vld [vmem:[#allocation2 + $0x58] sm:$0xff]
      %v808 = vld [vmem:[#allocation2 + $0x60] sm:$0xff]
      %v809 = vld [vmem:[#allocation2 + $0x68] sm:$0xff]
      %v810 = vld [vmem:[#allocation2 + $0x70] sm:$0xff]
      %v811 = vld [vmem:[#allocation2 + $0x78] sm:$0xff]
      %v812 = vld [vmem:[#allocation2 + $0x80] sm:$0xff]
      %v813 = vld [vmem:[#allocation2 + $0x88] sm:$0xff]
      %v814 = vld [vmem:[#allocation2 + $0x90] sm:$0xff]
      %v815 = vld [vmem:[#allocation2 + $0x98] sm:$0xff]
      %v816 = vld [vmem:[#allocation2 + $0xa0] sm:$0xff]
      %v817 = vld [vmem:[#allocation2 + $0xa8] sm:$0xff]
      %v818 = vld [vmem:[#allocation2 + $0xb0] sm:$0xff]
      %v819 = vld [vmem:[#allocation2 + $0xb8] sm:$0xff]
      %v820 = vld [vmem:[#allocation2 + $0xc0] sm:$0xff]
      %v821 = vld [vmem:[#allocation2 + $0xc8] sm:$0xff]
      %v822 = vld [vmem:[#allocation2 + $0xd0] sm:$0xff]
      %v823 = vld [vmem:[#allocation2 + $0xd8] sm:$0xff]
      %v824 = vld [vmem:[#allocation2 + $0xe0] sm:$0xff]
      %v825 = vld [vmem:[#allocation2 + $0xe8] sm:$0xff]
      %v826 = vld [vmem:[#allocation2 + $0xf0] sm:$0xff]
      %v827 = vld [vmem:[#allocation2 + $0xf8] sm:$0xff]
      %v828 = vld [vmem:[#allocation2 + $0x100] sm:$0xff]
      %v829 = vld [vmem:[#allocation2 + $0x108] sm:$0xff]
      %v830 = vld [vmem:[#allocation2 + $0x110] sm:$0xff]
      %v831 = vld [vmem:[#allocation2 + $0x118] sm:$0xff]
      %v832 = vld [vmem:[#allocation2 + $0x120] sm:$0xff]
      %v833 = vld [vmem:[#allocation2 + $0x128] sm:$0xff]
      %v834 = vld [vmem:[#allocation2 + $0x130] sm:$0xff]
      %v835 = vld [vmem:[#allocation2 + $0x138] sm:$0xff]
      %v836 = vld [vmem:[#allocation2 + $0x140] sm:$0xff]
      %v837 = vld [vmem:[#allocation2 + $0x148] sm:$0xff]
      %v838 = vld [vmem:[#allocation2 + $0x150] sm:$0xff]
      %v839 = vld [vmem:[#allocation2 + $0x158] sm:$0xff]
      %v840 = vld [vmem:[#allocation2 + $0x160] sm:$0xff]
      %v841 = vld [vmem:[#allocation2 + $0x168] sm:$0xff]
      %v842 = vld [vmem:[#allocation2 + $0x170] sm:$0xff]
      %v843 = vld [vmem:[#allocation2 + $0x178] sm:$0xff]
      %v844 = vld [vmem:[#allocation2 + $0x180] sm:$0xff]
      %v845 = vld [vmem:[#allocation2 + $0x188] sm:$0xff]
      %v846 = vld [vmem:[#allocation2 + $0x190] sm:$0xff]
      %v847 = vld [vmem:[#allocation2 + $0x198] sm:$0xff]
      %v848 = vld [vmem:[#allocation2 + $0x1a0] sm:$0xff]
      %v849 = vld [vmem:[#allocation2 + $0x1a8] sm:$0xff]
      %v850 = vld [vmem:[#allocation2 + $0x1b0] sm:$0xff]
      %v851 = vld [vmem:[#allocation2 + $0x1b8] sm:$0xff]
      %v852 = vld [vmem:[#allocation2 + $0x1c0] sm:$0xff]
      %v853 = vld [vmem:[#allocation2 + $0x1c8] sm:$0xff]
      %v854 = vld [vmem:[#allocation2 + $0x1d0] sm:$0xff]
      %v855 = vld [vmem:[#allocation2 + $0x1d8] sm:$0xff]
      %v856 = vld [vmem:[#allocation2 + $0x1e0] sm:$0xff]
      %v857 = vld [vmem:[#allocation2 + $0x1e8] sm:$0xff]
      %v858 = vld [vmem:[#allocation2 + $0x1f0] sm:$0xff]
      %v859 = vld [vmem:[#allocation2 + $0x1f8] sm:$0xff]
      %v860 = vld [vmem:[%s2] sm:$0x1]
      %v862 = vperm.slane %v860, 0
      %v864 = vmul.f32 %v796, %v862
      %v865 = vmul.f32 %v797, %v862
      %v866 = vmul.f32 %v798, %v862
      %v867 = vmul.f32 %v799, %v862
      %v868 = vmul.f32 %v800, %v862
      %v869 = vmul.f32 %v801, %v862
      %v870 = vmul.f32 %v802, %v862
      %v871 = vmul.f32 %v803, %v862
      %v872 = vmul.f32 %v804, %v862
      %v873 = vmul.f32 %v805, %v862
      %v874 = vmul.f32 %v806, %v862
      %v875 = vmul.f32 %v807, %v862
      %v876 = vmul.f32 %v808, %v862
      %v877 = vmul.f32 %v809, %v862
      %v878 = vmul.f32 %v810, %v862
      %v879 = vmul.f32 %v811, %v862
      %v880 = vmul.f32 %v812, %v862
      %v881 = vmul.f32 %v813, %v862
      %v882 = vmul.f32 %v814, %v862
      %v883 = vmul.f32 %v815, %v862
      %v884 = vmul.f32 %v816, %v862
      %v885 = vmul.f32 %v817, %v862
      %v886 = vmul.f32 %v818, %v862
      %v887 = vmul.f32 %v819, %v862
      %v888 = vmul.f32 %v820, %v862
      %v889 = vmul.f32 %v821, %v862
      %v890 = vmul.f32 %v822, %v862
      %v891 = vmul.f32 %v823, %v862
      %v892 = vmul.f32 %v824, %v862
      %v893 = vmul.f32 %v825, %v862
      %v894 = vmul.f32 %v826, %v862
      %v895 = vmul.f32 %v827, %v862
      %v896 = vmul.f32 %v828, %v862
      %v897 = vmul.f32 %v829, %v862
      %v898 = vmul.f32 %v830, %v862
      %v899 = vmul.f32 %v831, %v862
      %v900 = vmul.f32 %v832, %v862
      %v901 = vmul.f32 %v833, %v862
      %v902 = vmul.f32 %v834, %v862
      %v903 = vmul.f32 %v835, %v862
      %v904 = vmul.f32 %v836, %v862
      %v905 = vmul.f32 %v837, %v862
      %v906 = vmul.f32 %v838, %v862
      %v907 = vmul.f32 %v839, %v862
      %v908 = vmul.f32 %v840, %v862
      %v909 = vmul.f32 %v841, %v862
      %v910 = vmul.f32 %v842, %v862
      %v911 = vmul.f32 %v843, %v862
      %v912 = vmul.f32 %v844, %v862
      %v913 = vmul.f32 %v845, %v862
      %v914 = vmul.f32 %v846, %v862
      %v915 = vmul.f32 %v847, %v862
      %v916 = vmul.f32 %v848, %v862
      %v917 = vmul.f32 %v849, %v862
      %v918 = vmul.f32 %v850, %v862
      %v919 = vmul.f32 %v851, %v862
      %v920 = vmul.f32 %v852, %v862
      %v921 = vmul.f32 %v853, %v862
      %v922 = vmul.f32 %v854, %v862
      %v923 = vmul.f32 %v855, %v862
      %v924 = vmul.f32 %v856, %v862
      %v925 = vmul.f32 %v857, %v862
      %v926 = vmul.f32 %v858, %v862
      %v927 = vmul.f32 %v859, %v862
      %v928 = vld [vmem:[%s3] sm:$0x1]
      %v930 = vperm.slane %v928, 0
      %v932 = vadd.f32 %v864, %v930
      %v933 = vadd.f32 %v865, %v930
      %v934 = vadd.f32 %v866, %v930
      %v935 = vadd.f32 %v867, %v930
      %v936 = vadd.f32 %v868, %v930
      %v937 = vadd.f32 %v869, %v930
      %v938 = vadd.f32 %v870, %v930
      %v939 = vadd.f32 %v871, %v930
      %v940 = vadd.f32 %v872, %v930
      %v941 = vadd.f32 %v873, %v930
      %v942 = vadd.f32 %v874, %v930
      %v943 = vadd.f32 %v875, %v930
      %v944 = vadd.f32 %v876, %v930
      %v945 = vadd.f32 %v877, %v930
      %v946 = vadd.f32 %v878, %v930
      %v947 = vadd.f32 %v879, %v930
      %v948 = vadd.f32 %v880, %v930
      %v949 = vadd.f32 %v881, %v930
      %v950 = vadd.f32 %v882, %v930
      %v951 = vadd.f32 %v883, %v930
      %v952 = vadd.f32 %v884, %v930
      %v953 = vadd.f32 %v885, %v930
      %v954 = vadd.f32 %v886, %v930
      %v955 = vadd.f32 %v887, %v930
      %v956 = vadd.f32 %v888, %v930
      %v957 = vadd.f32 %v889, %v930
      %v958 = vadd.f32 %v890, %v930
      %v959 = vadd.f32 %v891, %v930
      %v960 = vadd.f32 %v892, %v930
      %v961 = vadd.f32 %v893, %v930
      %v962 = vadd.f32 %v894, %v930
      %v963 = vadd.f32 %v895, %v930
      %v964 = vadd.f32 %v896, %v930
      %v965 = vadd.f32 %v897, %v930
      %v966 = vadd.f32 %v898, %v930
      %v967 = vadd.f32 %v899, %v930
      %v968 = vadd.f32 %v900, %v930
      %v969 = vadd.f32 %v901, %v930
      %v970 = vadd.f32 %v902, %v930
      %v971 = vadd.f32 %v903, %v930
      %v972 = vadd.f32 %v904, %v930
      %v973 = vadd.f32 %v905, %v930
      %v974 = vadd.f32 %v906, %v930
      %v975 = vadd.f32 %v907, %v930
      %v976 = vadd.f32 %v908, %v930
      %v977 = vadd.f32 %v909, %v930
      %v978 = vadd.f32 %v910, %v930
      %v979 = vadd.f32 %v911, %v930
      %v980 = vadd.f32 %v912, %v930
      %v981 = vadd.f32 %v913, %v930
      %v982 = vadd.f32 %v914, %v930
      %v983 = vadd.f32 %v915, %v930
      %v984 = vadd.f32 %v916, %v930
      %v985 = vadd.f32 %v917, %v930
      %v986 = vadd.f32 %v918, %v930
      %v987 = vadd.f32 %v919, %v930
      %v988 = vadd.f32 %v920, %v930
      %v989 = vadd.f32 %v921, %v930
      %v990 = vadd.f32 %v922, %v930
      %v991 = vadd.f32 %v923, %v930
      %v992 = vadd.f32 %v924, %v930
      %v993 = vadd.f32 %v925, %v930
      %v994 = vadd.f32 %v926, %v930
      %v995 = vadd.f32 %v927, %v930
      %v996 = vmax.f32 %v932, 0.0
      %v997 = vmax.f32 %v933, 0.0
      %v998 = vmax.f32 %v934, 0.0
      %v999 = vmax.f32 %v935, 0.0
      %v1000 = vmax.f32 %v936, 0.0
      %v1001 = vmax.f32 %v937, 0.0
      %v1002 = vmax.f32 %v938, 0.0
      %v1003 = vmax.f32 %v939, 0.0
      %v1004 = vmax.f32 %v940, 0.0
      %v1005 = vmax.f32 %v941, 0.0
      %v1006 = vmax.f32 %v942, 0.0
      %v1007 = vmax.f32 %v943, 0.0
      %v1008 = vmax.f32 %v944, 0.0
      %v1009 = vmax.f32 %v945, 0.0
      %v1010 = vmax.f32 %v946, 0.0
      %v1011 = vmax.f32 %v947, 0.0
      %v1012 = vmax.f32 %v948, 0.0
      %v1013 = vmax.f32 %v949, 0.0
      %v1014 = vmax.f32 %v950, 0.0
      %v1015 = vmax.f32 %v951, 0.0
      %v1016 = vmax.f32 %v952, 0.0
      %v1017 = vmax.f32 %v953, 0.0
      %v1018 = vmax.f32 %v954, 0.0
      %v1019 = vmax.f32 %v955, 0.0
      %v1020 = vmax.f32 %v956, 0.0
      %v1021 = vmax.f32 %v957, 0.0
      %v1022 = vmax.f32 %v958, 0.0
      %v1023 = vmax.f32 %v959, 0.0
      %v1024 = vmax.f32 %v960, 0.0
      %v1025 = vmax.f32 %v961, 0.0
      %v1026 = vmax.f32 %v962, 0.0
      %v1027 = vmax.f32 %v963, 0.0
      %v1028 = vmax.f32 %v964, 0.0
      %v1029 = vmax.f32 %v965, 0.0
      %v1030 = vmax.f32 %v966, 0.0
      %v1031 = vmax.f32 %v967, 0.0
      %v1032 = vmax.f32 %v968, 0.0
      %v1033 = vmax.f32 %v969, 0.0
      %v1034 = vmax.f32 %v970, 0.0
      %v1035 = vmax.f32 %v971, 0.0
      %v1036 = vmax.f32 %v972, 0.0
      %v1037 = vmax.f32 %v973, 0.0
      %v1038 = vmax.f32 %v974, 0.0
      %v1039 = vmax.f32 %v975, 0.0
      %v1040 = vmax.f32 %v976, 0.0
      %v1041 = vmax.f32 %v977, 0.0
      %v1042 = vmax.f32 %v978, 0.0
      %v1043 = vmax.f32 %v979, 0.0
      %v1044 = vmax.f32 %v980, 0.0
      %v1045 = vmax.f32 %v981, 0.0
      %v1046 = vmax.f32 %v982, 0.0
      %v1047 = vmax.f32 %v983, 0.0
      %v1048 = vmax.f32 %v984, 0.0
      %v1049 = vmax.f32 %v985, 0.0
      %v1050 = vmax.f32 %v986, 0.0
      %v1051 = vmax.f32 %v987, 0.0
      %v1052 = vmax.f32 %v988, 0.0
      %v1053 = vmax.f32 %v989, 0.0
      %v1054 = vmax.f32 %v990, 0.0
      %v1055 = vmax.f32 %v991, 0.0
      %v1056 = vmax.f32 %v992, 0.0
      %v1057 = vmax.f32 %v993, 0.0
      %v1058 = vmax.f32 %v994, 0.0
      %v1059 = vmax.f32 %v995, 0.0
      %1060 = vst [vmem:[#allocation3] sm:$0xff] %v996
      %1061 = vst [vmem:[#allocation3 + $0x8] sm:$0xff] %v997
      %1062 = vst [vmem:[#allocation3 + $0x10] sm:$0xff] %v998
      %1063 = vst [vmem:[#allocation3 + $0x18] sm:$0xff] %v999
      %1064 = vst [vmem:[#allocation3 + $0x20] sm:$0xff] %v1000
      %1065 = vst [vmem:[#allocation3 + $0x28] sm:$0xff] %v1001
      %1066 = vst [vmem:[#allocation3 + $0x30] sm:$0xff] %v1002
      %1067 = vst [vmem:[#allocation3 + $0x38] sm:$0xff] %v1003
      %1068 = vst [vmem:[#allocation3 + $0x40] sm:$0xff] %v1004
      %1069 = vst [vmem:[#allocation3 + $0x48] sm:$0xff] %v1005
      %1070 = vst [vmem:[#allocation3 + $0x50] sm:$0xff] %v1006
      %1071 = vst [vmem:[#allocation3 + $0x58] sm:$0xff] %v1007
      %1072 = vst [vmem:[#allocation3 + $0x60] sm:$0xff] %v1008
      %1073 = vst [vmem:[#allocation3 + $0x68] sm:$0xff] %v1009
      %1074 = vst [vmem:[#allocation3 + $0x70] sm:$0xff] %v1010
      %1075 = vst [vmem:[#allocation3 + $0x78] sm:$0xff] %v1011
      %1076 = vst [vmem:[#allocation3 + $0x80] sm:$0xff] %v1012
      %1077 = vst [vmem:[#allocation3 + $0x88] sm:$0xff] %v1013
      %1078 = vst [vmem:[#allocation3 + $0x90] sm:$0xff] %v1014
      %1079 = vst [vmem:[#allocation3 + $0x98] sm:$0xff] %v1015
      %1080 = vst [vmem:[#allocation3 + $0xa0] sm:$0xff] %v1016
      %1081 = vst [vmem:[#allocation3 + $0xa8] sm:$0xff] %v1017
      %1082 = vst [vmem:[#allocation3 + $0xb0] sm:$0xff] %v1018
      %1083 = vst [vmem:[#allocation3 + $0xb8] sm:$0xff] %v1019
      %1084 = vst [vmem:[#allocation3 + $0xc0] sm:$0xff] %v1020
      %1085 = vst [vmem:[#allocation3 + $0xc8] sm:$0xff] %v1021
      %1086 = vst [vmem:[#allocation3 + $0xd0] sm:$0xff] %v1022
      %1087 = vst [vmem:[#allocation3 + $0xd8] sm:$0xff] %v1023
      %1088 = vst [vmem:[#allocation3 + $0xe0] sm:$0xff] %v1024
      %1089 = vst [vmem:[#allocation3 + $0xe8] sm:$0xff] %v1025
      %1090 = vst [vmem:[#allocation3 + $0xf0] sm:$0xff] %v1026
      %1091 = vst [vmem:[#allocation3 + $0xf8] sm:$0xff] %v1027
      %1092 = vst [vmem:[#allocation3 + $0x100] sm:$0xff] %v1028
      %1093 = vst [vmem:[#allocation3 + $0x108] sm:$0xff] %v1029
      %1094 = vst [vmem:[#allocation3 + $0x110] sm:$0xff] %v1030
      %1095 = vst [vmem:[#allocation3 + $0x118] sm:$0xff] %v1031
      %1096 = vst [vmem:[#allocation3 + $0x120] sm:$0xff] %v1032
      %1097 = vst [vmem:[#allocation3 + $0x128] sm:$0xff] %v1033
      %1098 = vst [vmem:[#allocation3 + $0x130] sm:$0xff] %v1034
      %1099 = vst [vmem:[#allocation3 + $0x138] sm:$0xff] %v1035
      %1100 = vst [vmem:[#allocation3 + $0x140] sm:$0xff] %v1036
      %1101 = vst [vmem:[#allocation3 + $0x148] sm:$0xff] %v1037
      %1102 = vst [vmem:[#allocation3 + $0x150] sm:$0xff] %v1038
      %1103 = vst [vmem:[#allocation3 + $0x158] sm:$0xff] %v1039
      %1104 = vst [vmem:[#allocation3 + $0x160] sm:$0xff] %v1040
      %1105 = vst [vmem:[#allocation3 + $0x168] sm:$0xff] %v1041
      %1106 = vst [vmem:[#allocation3 + $0x170] sm:$0xff] %v1042
      %1107 = vst [vmem:[#allocation3 + $0x178] sm:$0xff] %v1043
      %1108 = vst [vmem:[#allocation3 + $0x180] sm:$0xff] %v1044
      %1109 = vst [vmem:[#allocation3 + $0x188] sm:$0xff] %v1045
      %1110 = vst [vmem:[#allocation3 + $0x190] sm:$0xff] %v1046
      %1111 = vst [vmem:[#allocation3 + $0x198] sm:$0xff] %v1047
      %1112 = vst [vmem:[#allocation3 + $0x1a0] sm:$0xff] %v1048
      %1113 = vst [vmem:[#allocation3 + $0x1a8] sm:$0xff] %v1049
      %1114 = vst [vmem:[#allocation3 + $0x1b0] sm:$0xff] %v1050
      %1115 = vst [vmem:[#allocation3 + $0x1b8] sm:$0xff] %v1051
      %1116 = vst [vmem:[#allocation3 + $0x1c0] sm:$0xff] %v1052
      %1117 = vst [vmem:[#allocation3 + $0x1c8] sm:$0xff] %v1053
      %1118 = vst [vmem:[#allocation3 + $0x1d0] sm:$0xff] %v1054
      %1119 = vst [vmem:[#allocation3 + $0x1d8] sm:$0xff] %v1055
      %1120 = vst [vmem:[#allocation3 + $0x1e0] sm:$0xff] %v1056
      %1121 = vst [vmem:[#allocation3 + $0x1e8] sm:$0xff] %v1057
      %1122 = vst [vmem:[#allocation3 + $0x1f0] sm:$0xff] %v1058
      %1123 = vst [vmem:[#allocation3 + $0x1f8] sm:$0xff] %v1059
    $region25: #{tpu_custom_call.1} parent=1 // pred_fallthru
      _
    // Predicated region
    $region26: #{tpu_custom_call.1} parent=1 // pred_check
      _
    $region27: #{tpu_custom_call.1} parent=1 // pred_check_branch
      %1125 = sbr.rel (0) target = $region29
    $region28: #{tpu_custom_call.1} parent=1 // pred_region
      %1127 = vsyncadd [#allocation4], 0
      %s1128 = sshll.u32 [#allocation3], 4
      %s1129 = int_to_ptr.vmem [resolvable:$true] %s1128
      %s1130 = sshll.u32 %s4, 4
      %s1131 = int_to_ptr.hbm [resolvable:$true] %s1130
      %1136 = dma.vmem_to_hbm [thread:$0]  %s1129, 8192, %s1131, [#allocation4], 128, 128, 8
    $region29: #{tpu_custom_call.1} parent=1 // pred_fallthru
      _
    // Predicated region
    $region30: #{tpu_custom_call.1} parent=1 // pred_check
      _
    $region31: #{tpu_custom_call.1} parent=1 // pred_check_branch
      %1138 = sbr.rel (0) target = $region33
    $region32: #{tpu_custom_call.1} parent=1 // pred_region
      %1140 = dma.done [#allocation4], 8192
    $region33: #{tpu_custom_call.1} parent=1 // pred_fallthru
      _
    %1141 = vsyncpa [#allocation4], 1

</llo_original>
